<compile_context>
chip_gen: v7x
topology: tpu7x:2x2x1
jax: 0.10.0
libtpu: 0.0.40
codegen_flags: <defaults>
</compile_context>

<pallas_src>
import functools

import jax
import jax.numpy as jnp
from jax.experimental import pallas as pl
from jax.experimental.pallas import tpu as pltpu

LN_EPS = 1e-5  # RoBERTa layer_norm_eps


# --------------------------------------------------------------------------
# Generation-aware tiling knobs
# --------------------------------------------------------------------------
def _tpu_vmem_bytes():
    try:
        return int(pltpu.get_tpu_info().vmem_capacity_bytes)
    except Exception:
        return 128 * 1024 * 1024  # v5e / v6e default


_VMEM_BYTES = _tpu_vmem_bytes()
# v7x has 64 MiB VMEM per TensorCore -> smaller row tiles; v5e/v6e have 128 MiB.
_ROW_TILE = 256 if _VMEM_BYTES <= 64 * 1024 * 1024 else 512
_VMEM_LIMIT = min(_VMEM_BYTES * 3 // 4, 96 * 1024 * 1024)

_CPARAMS_1D = pltpu.CompilerParams(
    dimension_semantics=("parallel",), vmem_limit_bytes=_VMEM_LIMIT
)


def _row_tile(m):
    return m if m <= _ROW_TILE else _ROW_TILE


# --------------------------------------------------------------------------
# Pallas kernels
# --------------------------------------------------------------------------
def _ln_kernel(x_ref, g_ref, b_ref, o_ref):
    x = x_ref[...]
    mean = jnp.mean(x, axis=-1, keepdims=True)
    c = x - mean
    var = jnp.mean(c * c, axis=-1, keepdims=True)
    o_ref[...] = (c * jax.lax.rsqrt(var + LN_EPS) * g_ref[...] + b_ref[...]).astype(
        o_ref.dtype
    )


def layernorm(x, gamma, beta):
    """LayerNorm(x) (no residual), tiled over rows."""
    M, H = x.shape
    tm = _row_tile(M)
    return pl.pallas_call(
        _ln_kernel,
        out_shape=jax.ShapeDtypeStruct((M, H), jnp.float32),
        grid=(pl.cdiv(M, tm),),
        in_specs=[
            pl.BlockSpec((tm, H), lambda i: (i, 0)),
            pl.BlockSpec((1, H), lambda i: (0, 0)),
            pl.BlockSpec((1, H), lambda i: (0, 0)),
        ],
        out_specs=pl.BlockSpec((tm, H), lambda i: (i, 0)),
        compiler_params=_CPARAMS_1D,
    )(x, gamma.reshape(1, H), beta.reshape(1, H))


def _dense_kernel(x_ref, w_ref, b_ref, o_ref):
    xb = x_ref[...].astype(jnp.bfloat16)
    o_ref[...] = (
        jnp.dot(xb, w_ref[...], preferred_element_type=jnp.float32) + b_ref[...]
    ).astype(o_ref.dtype)


def dense(x, w_bf16, b):
    """y = x @ w + b; rows tiled, bf16 weight resident across the grid."""
    M, K = x.shape
    N = w_bf16.shape[1]
    tm = _row_tile(M)
    return pl.pallas_call(
        _dense_kernel,
        out_shape=jax.ShapeDtypeStruct((M, N), jnp.float32),
        grid=(pl.cdiv(M, tm),),
        in_specs=[
            pl.BlockSpec((tm, K), lambda i: (i, 0)),
            pl.BlockSpec((K, N), lambda i: (0, 0)),
            pl.BlockSpec((1, N), lambda i: (0, 0)),
        ],
        out_specs=pl.BlockSpec((tm, N), lambda i: (i, 0)),
        compiler_params=_CPARAMS_1D,
    )(x, w_bf16, b.reshape(1, N))


def _dense_add_ln_kernel(x_ref, w_ref, b_ref, r_ref, g_ref, bt_ref, o_ref):
    xb = x_ref[...].astype(jnp.bfloat16)
    y = (
        jnp.dot(xb, w_ref[...], preferred_element_type=jnp.float32)
        + b_ref[...]
        + r_ref[...]
    )
    mean = jnp.mean(y, axis=-1, keepdims=True)
    c = y - mean
    var = jnp.mean(c * c, axis=-1, keepdims=True)
    o_ref[...] = (c * jax.lax.rsqrt(var + LN_EPS) * g_ref[...] + bt_ref[...]).astype(
        o_ref.dtype
    )


def dense_add_layernorm(x, w_bf16, b, residual, gamma, beta):
    """LayerNorm(x @ w + b + residual) fused into the matmul epilogue."""
    M, K = x.shape
    N = w_bf16.shape[1]
    tm = _row_tile(M)
    return pl.pallas_call(
        _dense_add_ln_kernel,
        out_shape=jax.ShapeDtypeStruct((M, N), jnp.float32),
        grid=(pl.cdiv(M, tm),),
        in_specs=[
            pl.BlockSpec((tm, K), lambda i: (i, 0)),
            pl.BlockSpec((K, N), lambda i: (0, 0)),
            pl.BlockSpec((1, N), lambda i: (0, 0)),
            pl.BlockSpec((tm, N), lambda i: (i, 0)),
            pl.BlockSpec((1, N), lambda i: (0, 0)),
            pl.BlockSpec((1, N), lambda i: (0, 0)),
        ],
        out_specs=pl.BlockSpec((tm, N), lambda i: (i, 0)),
        compiler_params=_CPARAMS_1D,
    )(x, w_bf16, b.reshape(1, N), residual, gamma.reshape(1, N), beta.reshape(1, N))


def _ffn_add_ln_kernel(x_ref, w1_ref, b1_ref, w2_ref, b2_ref, g_ref, bt_ref, o_ref):
    x = x_ref[...]  # f32; doubles as the residual
    xb = x.astype(jnp.bfloat16)
    h = jnp.dot(xb, w1_ref[...], preferred_element_type=jnp.float32) + b1_ref[...]
    # TODO(synk): HF RoBERTa's default activation is exact erf-GELU; tanh-approx
    # GELU used here (erf lowering availability in Mosaic not guaranteed).
    g = 0.5 * h * (1.0 + jnp.tanh(0.7978845608028654 * (h + 0.044715 * h * h * h)))
    y = (
        jnp.dot(g.astype(jnp.bfloat16), w2_ref[...], preferred_element_type=jnp.float32)
        + b2_ref[...]
        + x
    )
    mean = jnp.mean(y, axis=-1, keepdims=True)
    c = y - mean
    var = jnp.mean(c * c, axis=-1, keepdims=True)
    o_ref[...] = (c * jax.lax.rsqrt(var + LN_EPS) * g_ref[...] + bt_ref[...]).astype(
        o_ref.dtype
    )


def ffn_add_layernorm(x, w1_bf16, b1, w2_bf16, b2, gamma, beta):
    """Fused intermediate->GELU->output->residual->LayerNorm, tiled over rows."""
    M, H = x.shape
    I = w1_bf16.shape[1]
    tm = _row_tile(M)
    return pl.pallas_call(
        _ffn_add_ln_kernel,
        out_shape=jax.ShapeDtypeStruct((M, H), jnp.float32),
        grid=(pl.cdiv(M, tm),),
        in_specs=[
            pl.BlockSpec((tm, H), lambda i: (i, 0)),
            pl.BlockSpec((H, I), lambda i: (0, 0)),
            pl.BlockSpec((1, I), lambda i: (0, 0)),
            pl.BlockSpec((I, H), lambda i: (0, 0)),
            pl.BlockSpec((1, H), lambda i: (0, 0)),
            pl.BlockSpec((1, H), lambda i: (0, 0)),
            pl.BlockSpec((1, H), lambda i: (0, 0)),
        ],
        out_specs=pl.BlockSpec((tm, H), lambda i: (i, 0)),
        compiler_params=_CPARAMS_1D,
    )(x, w1_bf16, b1.reshape(1, I), w2_bf16, b2.reshape(1, H),
      gamma.reshape(1, H), beta.reshape(1, H))


def _attn_kernel(qkv_ref, m_ref, o_ref, *, num_heads, head_dim, scale):
    H = num_heads * head_dim
    qkv = qkv_ref[0]          # (S, 3H) f32
    bias = m_ref[0]           # (1, S) additive mask: 0 keep, -1e9 pad (over keys)
    ctx_heads = []
    # Per-head loop keeps the softmax scratch bounded at (S, S) per head and
    # lets the context be assembled lane-dense as (S, H) inside the kernel.
    for h in range(num_heads):
        lo = h * head_dim
        qh = qkv[:, lo:lo + head_dim].astype(jnp.bfloat16)
        kh = qkv[:, H + lo:H + lo + head_dim].astype(jnp.bfloat16)
        vh = qkv[:, 2 * H + lo:2 * H + lo + head_dim].astype(jnp.bfloat16)
        s = jax.lax.dot_general(
            qh, kh, (((1,), (1,)), ((), ())), preferred_element_type=jnp.float32
        )                                           # (S, S) = q @ k^T
        s = s * scale + bias
        s = s - jnp.max(s, axis=-1, keepdims=True)
        e = jnp.exp(s)
        p = e * pl.reciprocal(jnp.sum(e, axis=-1, keepdims=True), approx=True)
        ctx_heads.append(
            jnp.dot(p.astype(jnp.bfloat16), vh, preferred_element_type=jnp.float32)
        )                                           # (S, dH)
    o_ref[0] = jnp.concatenate(ctx_heads, axis=-1).astype(o_ref.dtype)  # (S, H)


def attention(qkv, add_mask, *, num_heads, head_dim, scale):
    """Self-attention on fused qkv (B, S, 3H) -> lane-dense context (B, S, H)."""
    B, S, H3 = qkv.shape
    H = H3 // 3
    kern = functools.partial(
        _attn_kernel, num_heads=num_heads, head_dim=head_dim, scale=scale
    )
    return pl.pallas_call(
        kern,
        out_shape=jax.ShapeDtypeStruct((B, S, H), jnp.float32),
        grid=(B,),
        in_specs=[
            pl.BlockSpec((1, S, H3), lambda b: (b, 0, 0)),
            pl.BlockSpec((1, 1, S), lambda b: (b, 0, 0)),
        ],
        out_specs=pl.BlockSpec((1, S, H), lambda b: (b, 0, 0)),
        compiler_params=_CPARAMS_1D,
    )(qkv, add_mask)


# --------------------------------------------------------------------------
# Model (plain-JAX orchestration calling the Pallas kernels)
# --------------------------------------------------------------------------
def _prep_layer_weights(layer):
    """Fuse QKV weights and cast matmul weights to bf16 (f32 masters kept)."""
    return {
        "wqkv": jnp.concatenate(
            [layer["wq"], layer["wk"], layer["wv"]], axis=1
        ).astype(jnp.bfloat16),
        "bqkv": jnp.concatenate([layer["bq"], layer["bk"], layer["bv"]]),
        "wo": layer["wo"].astype(jnp.bfloat16),
        "bo": layer["bo"],
        "ln1_g": layer["ln1_g"],
        "ln1_b": layer["ln1_b"],
        "w1": layer["w1"].astype(jnp.bfloat16),
        "b1": layer["b1"],
        "w2": layer["w2"].astype(jnp.bfloat16),
        "b2": layer["b2"],
        "ln2_g": layer["ln2_g"],
        "ln2_b": layer["ln2_b"],
    }


def roberta_encoder(params, cfg, input_ids, attention_mask, token_type_ids=None,
                    position_ids=None):
    B, S = input_ids.shape
    H = cfg["hidden_size"]
    nH = cfg["num_heads"]
    dH = H // nH

    if attention_mask is None:
        attention_mask = jnp.ones((B, S), jnp.float32)
    if token_type_ids is None:
        token_type_ids = jnp.zeros((B, S), jnp.int32)
    if position_ids is None:
        # RoBERTa: positions offset by padding_idx, pads stay at padding_idx.
        m = (input_ids != cfg["pad_token_id"]).astype(jnp.int32)
        position_ids = jnp.cumsum(m, axis=1) * m + cfg["pad_token_id"]

    # Embedding gathers are glue (plain JAX).
    emb = (
        jnp.take(params["word_emb"], input_ids, axis=0)
        + jnp.take(params["pos_emb"], position_ids, axis=0)
        + jnp.take(params["type_emb"], token_type_ids, axis=0)
    ).astype(jnp.float32)

    x = layernorm(emb.reshape(B * S, H), params["emb_ln_g"], params["emb_ln_b"])
    # Embedding dropout: identity in eval mode.

    add_mask = ((1.0 - attention_mask.astype(jnp.float32)) * -1e9).reshape(B, 1, S)
    scale = 1.0 / (dH ** 0.5)

    for layer in params["layers"]:
        lw = _prep_layer_weights(layer)
        qkv = dense(x, lw["wqkv"], lw["bqkv"])                    # (B*S, 3H)
        ctx = attention(
            qkv.reshape(B, S, 3 * H), add_mask,
            num_heads=nH, head_dim=dH, scale=scale,
        )                                                         # (B, S, H)
        # Attention dropout: identity in eval mode.
        x = dense_add_layernorm(
            ctx.reshape(B * S, H), lw["wo"], lw["bo"], x, lw["ln1_g"], lw["ln1_b"]
        )
        x = ffn_add_layernorm(
            x, lw["w1"], lw["b1"], lw["w2"], lw["b2"], lw["ln2_g"], lw["ln2_b"]
        )

    return x.reshape(B, S, H)


def bce_with_logits_smoothed(logits, target, label_smoothing):
    """BCEWithLogitsLossSmoothed.forward (mean reduction)."""
    x = jnp.squeeze(logits)
    t = jnp.squeeze(target)
    p = jax.nn.sigmoid(x)
    # PyTorch BCELoss clamps log terms at -100; log_sigmoid keeps them finite.
    logp = jnp.maximum(jax.nn.log_sigmoid(x), -100.0)
    log1mp = jnp.maximum(jax.nn.log_sigmoid(-x), -100.0)
    entropy = jnp.mean(-(p * logp + (1.0 - p) * log1mp))
    bce = jnp.mean(jnp.maximum(x, 0.0) - x * t + jnp.log1p(jnp.exp(-jnp.abs(x))))
    return bce - label_smoothing * entropy


def roberta_classifier_forward(params, cfg, input_ids, attention_mask=None,
                               labels=None):
    seq_out = roberta_encoder(params, cfg, input_ids, attention_mask)
    x = seq_out[:, 0, :]  # <s> / CLS token hidden state
    # Classifier dropout: identity in eval mode.
    # num_labels is tiny (1): a Pallas call here would be pure launch overhead,
    # so the head GEMV stays in plain JAX (per perf review).
    logits = x @ params["cls_w"] + params["cls_b"]
    loss = None
    if labels is not None:
        loss = bce_with_logits_smoothed(
            logits, labels.astype(jnp.float32), cfg["label_smoothing"]
        )
    return loss, logits


# --------------------------------------------------------------------------
# Deterministic synthetic parameters
# --------------------------------------------------------------------------
def init_params(key, cfg):
    H = cfg["hidden_size"]
    I = cfg["intermediate_size"]
    keys = jax.random.split(key, 64)
    it = iter(keys)

    def nrm(shape):
        return 0.02 * jax.random.normal(next(it), shape, jnp.float32)

    params = {
        "word_emb": nrm((cfg["vocab_size"], H)).at[cfg["pad_token_id"]].set(0.0),
        "pos_emb": nrm((cfg["max_position_embeddings"], H)),
        "type_emb": nrm((cfg["type_vocab_size"], H)),
        "emb_ln_g": jnp.ones((H,), jnp.float32),
        "emb_ln_b": jnp.zeros((H,), jnp.float32),
        "layers": [],
        "cls_w": nrm((H, cfg["num_labels"])),
        "cls_b": jnp.zeros((cfg["num_labels"],), jnp.float32),
    }
    for _ in range(cfg["num_layers"]):
        params["layers"].append(
            {
                "wq": nrm((H, H)), "bq": jnp.zeros((H,), jnp.float32),
                "wk": nrm((H, H)), "bk": jnp.zeros((H,), jnp.float32),
                "wv": nrm((H, H)), "bv": jnp.zeros((H,), jnp.float32),
                "wo": nrm((H, H)), "bo": jnp.zeros((H,), jnp.float32),
                "ln1_g": jnp.ones((H,), jnp.float32),
                "ln1_b": jnp.zeros((H,), jnp.float32),
                "w1": nrm((H, I)), "b1": jnp.zeros((I,), jnp.float32),
                "w2": nrm((I, H)), "b2": jnp.zeros((H,), jnp.float32),
                "ln2_g": jnp.ones((H,), jnp.float32),
                "ln2_b": jnp.zeros((H,), jnp.float32),
            }
        )
    return params


if __name__ == "__main__":
    cfg = dict(
        vocab_size=50,
        hidden_size=32,
        num_heads=2,
        intermediate_size=64,
        num_layers=2,
        max_position_embeddings=16,
        type_vocab_size=1,
        pad_token_id=1,
        num_labels=1,
        label_smoothing=0.1,
    )

    key = jax.random.PRNGKey(0)
    pkey, dkey = jax.random.split(key)
    params = init_params(pkey, cfg)

    B, S = 2, 8
    input_ids = jax.random.randint(dkey, (B, S), 3, cfg["vocab_size"], dtype=jnp.int32)
    input_ids = input_ids.at[:, 0].set(0)                      # <s> (CLS) token
    input_ids = input_ids.at[1, 6:].set(cfg["pad_token_id"])   # pad tail of seq 1
    attention_mask = (input_ids != cfg["pad_token_id"]).astype(jnp.float32)
    labels = jnp.array([0.0, 1.0], jnp.float32)

    loss, logits = roberta_classifier_forward(
        params, cfg, input_ids, attention_mask, labels
    )
    jax.block_until_ready((loss, logits))
    print("KERNEL_OK")
</pallas_src>

<mosaic_0001>
module attributes {stable_mosaic.version = 11 : i64} {
  func.func @_ln_kernel(%arg0: i32, %arg1: memref<16x32xf32, #tpu.memory_space<vmem>>, %arg2: memref<1x32xf32, #tpu.memory_space<vmem>>, %arg3: memref<1x32xf32, #tpu.memory_space<vmem>>, %arg4: memref<16x32xf32, #tpu.memory_space<vmem>>) attributes {dimension_semantics = [#tpu.dimension_semantics<parallel>], iteration_bounds = array<i64: 1>, scalar_prefetch = 0 : i64, scratch_operands = 0 : i64, tpu.core_type = #tpu.core_type<tc>, window_params = [{transform_indices = @transform_0, window_bounds = array<i64: 16, 32>}, {pipeline_mode = #tpu.pipeline_mode<synchronous>, transform_indices = @transform_1, window_bounds = array<i64: 1, 32>}, {pipeline_mode = #tpu.pipeline_mode<synchronous>, transform_indices = @transform_2, window_bounds = array<i64: 1, 32>}, {transform_indices = @transform_3, window_bounds = array<i64: 16, 32>}]} {
    %c0 = arith.constant 0 : index
    %c0_0 = arith.constant 0 : index
    %0 = vector.load %arg1[%c0, %c0_0] : memref<16x32xf32, #tpu.memory_space<vmem>>, vector<16x32xf32>
    %cst = arith.constant dense<0.000000e+00> : vector<16xf32>
    %1 = vector.multi_reduction <add>, %0, %cst [1] : vector<16x32xf32> to vector<16xf32>
    %2 = vector.shape_cast %1 : vector<16xf32> to vector<16x1xf32>
    %cst_1 = arith.constant 3.200000e+01 : f32
    %3 = vector.broadcast %cst_1 : f32 to vector<16x1xf32>
    %4 = arith.divf %2, %3 : vector<16x1xf32>
    %5 = vector.broadcast %4 : vector<16x1xf32> to vector<16x32xf32>
    %6 = arith.subf %0, %5 : vector<16x32xf32>
    %7 = arith.mulf %6, %6 : vector<16x32xf32>
    %cst_2 = arith.constant dense<0.000000e+00> : vector<16xf32>
    %8 = vector.multi_reduction <add>, %7, %cst_2 [1] : vector<16x32xf32> to vector<16xf32>
    %9 = vector.shape_cast %8 : vector<16xf32> to vector<16x1xf32>
    %cst_3 = arith.constant 3.200000e+01 : f32
    %10 = vector.broadcast %cst_3 : f32 to vector<16x1xf32>
    %11 = arith.divf %9, %10 : vector<16x1xf32>
    %cst_4 = arith.constant 9.99999974E-6 : f32
    %12 = vector.broadcast %cst_4 : f32 to vector<16x1xf32>
    %13 = arith.addf %11, %12 : vector<16x1xf32>
    %14 = math.rsqrt %13 : vector<16x1xf32>
    %15 = vector.broadcast %14 : vector<16x1xf32> to vector<16x32xf32>
    %16 = arith.mulf %6, %15 : vector<16x32xf32>
    %c0_5 = arith.constant 0 : index
    %c0_6 = arith.constant 0 : index
    %17 = vector.load %arg2[%c0_5, %c0_6] : memref<1x32xf32, #tpu.memory_space<vmem>>, vector<1x32xf32>
    %18 = vector.broadcast %17 : vector<1x32xf32> to vector<16x32xf32>
    %19 = arith.mulf %16, %18 : vector<16x32xf32>
    %c0_7 = arith.constant 0 : index
    %c0_8 = arith.constant 0 : index
    %20 = vector.load %arg3[%c0_7, %c0_8] : memref<1x32xf32, #tpu.memory_space<vmem>>, vector<1x32xf32>
    %21 = vector.broadcast %20 : vector<1x32xf32> to vector<16x32xf32>
    %22 = arith.addf %19, %21 : vector<16x32xf32>
    %c0_9 = arith.constant 0 : index
    %c0_10 = arith.constant 0 : index
    %23 = vector.load %arg4[%c0_9, %c0_10] : memref<16x32xf32, #tpu.memory_space<vmem>>, vector<16x32xf32>
    tpu.vector_store %arg4[%c0_9, %c0_10], %22 {strides = array<i32>} : memref<16x32xf32, #tpu.memory_space<vmem>>, vector<16x32xf32>,
    return
  }
  func.func @transform_0(%arg0: i32) -> (i32, i32) {
    %c0_i32 = arith.constant 0 : i32
    %c0_i32_0 = arith.constant 0 : i32
    return %arg0, %c0_i32 : i32, i32
  }
  func.func @transform_1(%arg0: i32) -> (i32, i32) {
    %c0_i32 = arith.constant 0 : i32
    %c0_i32_0 = arith.constant 0 : i32
    %c0_i32_1 = arith.constant 0 : i32
    return %c0_i32, %c0_i32_0 : i32, i32
  }
  func.func @transform_2(%arg0: i32) -> (i32, i32) {
    %c0_i32 = arith.constant 0 : i32
    %c0_i32_0 = arith.constant 0 : i32
    %c0_i32_1 = arith.constant 0 : i32
    return %c0_i32, %c0_i32_0 : i32, i32
  }
  func.func @transform_3(%arg0: i32) -> (i32, i32) {
    %c0_i32 = arith.constant 0 : i32
    %c0_i32_0 = arith.constant 0 : i32
    return %arg0, %c0_i32 : i32, i32
  }
}

</mosaic_0001>

<llo_original>
// kernel: tpu_custom_call.1
$region0: #{tpu_custom_call.1}
  #allocation0 [shape = 'u32[]', space=smem, size = 0x4, offset = 0x4, fixed_abs, tag = 'smem constant byte address 0x4 - core index']
  #allocation1 [shape = 'u32[144,128]{1,0:T(1,128)}', space=vmem, size = 0x12000, scoped, tag = 'internal scratch']
  %s0 = inlined_call_operand.hbm [shape: f32[16,32], index: 0, kind: input, shape index: {}]
  %s1 = inlined_call_operand.hbm [shape: f32[1,32], index: 1, kind: input, shape index: {}]
  %s2 = inlined_call_operand.hbm [shape: f32[1,32], index: 2, kind: input, shape index: {}]
  %s3 = inlined_call_operand.hbm [shape: f32[16,32], index: 3, kind: output, shape index: {}]
  %s4 = sld [smem:[#allocation0]]
  $region34: #{tpu_custom_call.1} parent=0
    _
  %s6 = ssub.s32 1, %s4
  %s7 = scalar_select 0, %s6, %s4
  $region1: #{tpu_custom_call.1} parent=0
    #allocation2 [shape = 'u8[8192]{0}', space=vmem, size = 0x2000, scoped, tag = 'input window, operand 0, single buffered']
    #allocation3 [shape = 's32[1]{0}', space=sflag, size = 0x4, scoped, tag = 'scoped memory for tpu_custom_call.1']
    #allocation4 [shape = 's32[1]{0}', space=sflag, size = 0x4, scoped, tag = 'scoped memory for tpu_custom_call.1']
    #allocation5 [shape = 'u8[512]{0}', space=vmem, size = 0x400, scoped, tag = 'input window, operand 1, single buffered']
    #allocation6 [shape = 's32[1]{0}', space=sflag, size = 0x4, scoped, tag = 'scoped memory for tpu_custom_call.1']
    #allocation7 [shape = 'u8[512]{0}', space=vmem, size = 0x400, scoped, tag = 'input window, operand 2, single buffered']
    #allocation8 [shape = 'u8[8192]{0}', space=vmem, size = 0x2000, scoped, tag = 'output window, operand 0, single buffered']
    %8 = vsyncpa [#allocation3], 0
    %9 = vsyncpa [#allocation6], 0
    %10 = vsyncpa [#allocation4], 0
    // Predicated region
    $region2: #{tpu_custom_call.1} parent=1 // pred_check
      _
    $region3: #{tpu_custom_call.1} parent=1 // pred_check_branch
      %12 = sbr.rel (0) target = $region5
    $region4: #{tpu_custom_call.1} parent=1 // pred_region
      %s14 = ssub.s32 256, 256
      %15 = vsyncadd [#allocation3], %s14
      %s16 = sshll.u32 [#allocation2], 4
      %s17 = int_to_ptr.vmem [resolvable:$true] %s16
      %22 = dma.hbm_to_vmem [thread:$0]  %s0, 256, %s17, [#allocation3], 128, 128, 8
    $region5: #{tpu_custom_call.1} parent=1 // pred_fallthru
      _
    // Predicated region
    $region6: #{tpu_custom_call.1} parent=1 // pred_check
      _
    $region7: #{tpu_custom_call.1} parent=1 // pred_check_branch
      %24 = sbr.rel (0) target = $region9
    $region8: #{tpu_custom_call.1} parent=1 // pred_region
      %s26 = ssub.s32 16, 16
      %27 = vsyncadd [#allocation6], %s26
      %s29 = sshll.u32 [#allocation5], 4
      %s30 = int_to_ptr.vmem [resolvable:$true] %s29
      %32 = dma.hbm_to_vmem [thread:$0]  %s1, 16, %s30, [#allocation6]
    $region9: #{tpu_custom_call.1} parent=1 // pred_fallthru
      _
    // Predicated region
    $region10: #{tpu_custom_call.1} parent=1 // pred_check
      _
    $region11: #{tpu_custom_call.1} parent=1 // pred_check_branch
      %34 = sbr.rel (0) target = $region13
    $region12: #{tpu_custom_call.1} parent=1 // pred_region
      %s36 = ssub.s32 16, 16
      %37 = vsyncadd [#allocation6], %s36
      %s39 = sshll.u32 [#allocation7], 4
      %s40 = int_to_ptr.vmem [resolvable:$true] %s39
      %42 = dma.hbm_to_vmem [thread:$0]  %s2, 16, %s40, [#allocation6]
    $region13: #{tpu_custom_call.1} parent=1 // pred_fallthru
      _
    // Predicated region
    $region14: #{tpu_custom_call.1} parent=1 // pred_check
      _
    $region15: #{tpu_custom_call.1} parent=1 // pred_check_branch
      %44 = sbr.rel (0) target = $region17
    $region16: #{tpu_custom_call.1} parent=1 // pred_region
      %45 = dma.done [#allocation3], 256
    $region17: #{tpu_custom_call.1} parent=1 // pred_fallthru
      _
    // Predicated region
    $region18: #{tpu_custom_call.1} parent=1 // pred_check
      _
    $region19: #{tpu_custom_call.1} parent=1 // pred_check_branch
      %47 = sbr.rel (0) target = $region21
    $region20: #{tpu_custom_call.1} parent=1 // pred_region
      %48 = dma.done [#allocation6], 16
    $region21: #{tpu_custom_call.1} parent=1 // pred_fallthru
      _
    // Predicated region
    $region22: #{tpu_custom_call.1} parent=1 // pred_check
      _
    $region23: #{tpu_custom_call.1} parent=1 // pred_check_branch
      %50 = sbr.rel (0) target = $region25
    $region24: #{tpu_custom_call.1} parent=1 // pred_region
      %51 = dma.done [#allocation6], 16
    $region25: #{tpu_custom_call.1} parent=1 // pred_fallthru
      _
    %v52 = vld [vmem:[#allocation2] sm:$0xff]
    %v53 = vld [vmem:[#allocation2 + $0x8] sm:$0xff]
    %vm54 = vcmask 261120
    %v55 = vsel %vm54, %v52, 0.0
    %56 = vadd.xlane.f32.xlu0 %v55
    %v57 = vpop.xlane.xlu0 %56
    %v58 = vsel %vm54, %v53, 0.0
    %59 = vadd.xlane.f32.xlu0 %v58
    %v60 = vpop.xlane.xlu0 %59
    %v61 = vrcp.pop 32.0
    %v62 = vmul.f32 %v57, %v61
    %v63 = vmul.f32 %v60, %v61
    %v64 = vsub.f32 %v52, %v62
    %v65 = vsub.f32 %v53, %v63
    %v66 = vmul.f32 %v64, %v64
    %v67 = vmul.f32 %v65, %v65
    %v68 = vsel %vm54, %v66, 0.0
    %69 = vadd.xlane.f32.xlu0 %v68
    %v70 = vpop.xlane.xlu0 %69
    %v71 = vsel %vm54, %v67, 0.0
    %72 = vadd.xlane.f32.xlu0 %v71
    %v73 = vpop.xlane.xlu0 %72
    %v74 = vmul.f32 %v70, %v61
    %v75 = vmul.f32 %v73, %v61
    %v76 = vadd.f32 %v74, 1e-05
    %v77 = vadd.f32 %v75, 1e-05
    %v78 = vrsqrt.pop %v76
    %v79 = vrsqrt.pop %v77
    %v80 = vmul.f32 %v64, %v78
    %v81 = vmul.f32 %v65, %v79
    %v82 = vld [vmem:[#allocation5] sm:$0x1]
    %v84 = vlaneseq
    %v85 = vshrl.u32 %v84, 7
    %v86 = vsub.s32 0, %v85
    %v87 = vrot.slane %v82, %v86
    %v89 = vmul.f32 %v80, %v87
    %v90 = vmul.f32 %v81, %v87
    %v91 = vld [vmem:[#allocation7] sm:$0x1]
    %v93 = vlaneseq
    %v94 = vshrl.u32 %v93, 7
    %v95 = vsub.s32 0, %v94
    %v96 = vrot.slane %v91, %v95
    %v98 = vadd.f32 %v89, %v96
    %v99 = vadd.f32 %v90, %v96
    %100 = vst.msk [vmem:[#allocation8] sm:$0xff] %vm54, %v98
    %101 = vst.msk [vmem:[#allocation8 + $0x8] sm:$0xff] %vm54, %v99
    // Predicated region
    $region26: #{tpu_custom_call.1} parent=1 // pred_check
      _
    $region27: #{tpu_custom_call.1} parent=1 // pred_check_branch
      %103 = sbr.rel (0) target = $region29
    $region28: #{tpu_custom_call.1} parent=1 // pred_region
      %s105 = ssub.s32 256, 256
      %106 = vsyncadd [#allocation4], %s105
      %s107 = sshll.u32 [#allocation8], 4
      %s108 = int_to_ptr.vmem [resolvable:$true] %s107
      %113 = dma.vmem_to_hbm [thread:$0]  %s108, 256, %s3, [#allocation4], 128, 128, 8
    $region29: #{tpu_custom_call.1} parent=1 // pred_fallthru
      _
    // Predicated region
    $region30: #{tpu_custom_call.1} parent=1 // pred_check
      _
    $region31: #{tpu_custom_call.1} parent=1 // pred_check_branch
      %115 = sbr.rel (0) target = $region33
    $region32: #{tpu_custom_call.1} parent=1 // pred_region
      %116 = dma.done [#allocation4], 256
    $region33: #{tpu_custom_call.1} parent=1 // pred_fallthru
      _
    %117 = vsyncpa [#allocation3], 1
    %118 = vsyncpa [#allocation6], 1
    %119 = vsyncpa [#allocation4], 1

</llo_original>
